<compile_context>
chip_gen: v7x
topology: tpu7x:2x2x1
jax: 0.10.0
libtpu: 0.0.40
codegen_flags: <defaults>
</compile_context>

<pallas_src>
import jax
import jax.numpy as jnp
import numpy as np
from jax.experimental import pallas as pl
from jax.experimental.pallas import tpu as pltpu


def _patch_embed_matmul_kernel(p_ref, w_ref, b_ref, o_ref):
    """p_ref: (tm, K) patch rows, w_ref: (K, E), b_ref: (1, E) f32, o_ref: (tm, E)."""
    acc = jnp.dot(p_ref[...], w_ref[...], preferred_element_type=jnp.float32)
    o_ref[...] = (acc + b_ref[...]).astype(o_ref.dtype)


def _vmem_capacity_bytes():
    try:
        info = pltpu.get_tpu_info()
        cap = getattr(info, "vmem_capacity_bytes", None)
        if cap:
            return int(cap)
    except Exception:
        pass
    return 64 << 20  # conservative floor: v7x has 64 MiB VMEM per TensorCore


def _pick_row_tile(M, K, E, in_item, out_item, budget):
    """Largest MXU-friendly row tile that fits `budget` bytes of VMEM and keeps
    the grid at >= 2 steps (so both TensorCores get work on megacore/v7x)."""
    resident = 2 * (K * E * in_item + E * 4)            # weight+bias (assume 2 copies)
    per_row = 2 * (K * in_item + E * out_item)          # double-buffered in/out tiles
    cap = max((budget - resident) // max(per_row, 1), 8)
    tm = int(min(1024, cap, M, (-(-M // 2)) if M > 8 else M))
    for mult in (256, 128, 8):                          # MXU / sublane friendly rounding
        if tm >= mult:
            tm = (tm // mult) * mult
            break
    tm = max(tm, 8)
    if M % tm:                                          # prefer an exact divisor of M
        for cand in range(tm, max(tm // 2, 8) - 1, -8):
            if M % cand == 0:
                tm = cand
                break
    return tm


def patch_embed_forward(x, weight, bias, *, tubelet_size, patch_size,
                        compute_dtype=None):
    """x: (B, C, T, H, W); weight: (E, C, ts, ph, pw) [PyTorch Conv3d layout];
    bias: (E,).  Returns (B, N, E), matching `proj(x).flatten(2).transpose(1, 2)`.

    compute_dtype: dtype fed to the MXU (default: x.dtype).  On v7x (bf16/fp8
    MXU only) pass jnp.bfloat16 for float32 models; accumulation stays float32.
    """
    B, C, T, H, W = x.shape
    ts = int(tubelet_size)
    if isinstance(patch_size, (tuple, list)):
        ph, pw = int(patch_size[0]), int(patch_size[1])
    else:
        ph = pw = int(patch_size)
    E = weight.shape[0]
    Tp, Hp, Wp = T // ts, H // ph, W // pw
    N = Tp * Hp * Wp
    K = C * ts * ph * pw
    M = B * N

    out_dtype = x.dtype          # keep module semantics (conv output dtype)
    # TODO(synk): downstream-permitting, a bf16 out_dtype would halve the
    # output-store stream (relevant on v5e's single store slot).
    compute_dtype = jnp.dtype(out_dtype if compute_dtype is None else compute_dtype)
    in_item = compute_dtype.itemsize
    out_item = jnp.dtype(out_dtype).itemsize

    # ---- im2col (layout plumbing only; exposed to XLA input fusion so it can
    # be folded into the kernel's operand-0 pipeline instead of a separate HBM
    # round-trip) ----
    # (B, C, T, H, W) -> (B, Tp, Hp, Wp, C, ts, ph, pw) -> (B*N, K)
    patches = x.astype(compute_dtype).reshape(B, C, Tp, ts, Hp, ph, Wp, pw)
    patches = patches.transpose(0, 2, 4, 6, 1, 3, 5, 7).reshape(M, K)

    # Conv weight (E, C, ts, ph, pw) -> (K, E); tiny, done once in the wrapper.
    w_t = weight.reshape(E, K).T.astype(compute_dtype)
    b2 = bias.reshape(1, E).astype(jnp.float32)

    # Lane-align K (no-op for the common ViT sizes where K is already 128-aligned).
    K_pad = pl.cdiv(K, 128) * 128
    if K_pad != K:
        patches = jnp.pad(patches, ((0, 0), (0, K_pad - K)))
        w_t = jnp.pad(w_t, ((0, K_pad - K), (0, 0)))

    # ---- row tiling / VMEM budget ----
    vmem_cap = _vmem_capacity_bytes()
    budget = min(int(0.55 * vmem_cap), 40 << 20)
    tm = _pick_row_tile(M, K_pad, E, in_item, out_item, budget)
    num_tiles = pl.cdiv(M, tm)

    needed = (2 * (K_pad * E * in_item + E * 4)
              + 2 * tm * (K_pad * in_item + E * out_item))
    vmem_limit = int(min(max(int(needed * 1.25), 4 << 20), int(0.9 * vmem_cap)))

    cost = pl.CostEstimate(
        flops=2 * M * K_pad * E,
        bytes_accessed=(M * K_pad * in_item + K_pad * E * in_item
                        + M * E * out_item),
        transcendentals=0,
    )
    compiler_params = pltpu.CompilerParams(
        dimension_semantics=("parallel",),      # shard row tiles across TCs
        vmem_limit_bytes=vmem_limit,
        allow_input_fusion=[0],                 # let XLA fuse the im2col producer
    )

    def build(single_buffer_consts):
        if single_buffer_consts:
            # Constant index_map -> one resident VMEM copy of weight/bias suffices.
            w_spec = pl.BlockSpec((K_pad, E), lambda i: (0, 0),
                                  pipeline_mode=pl.Buffered(1))
            b_spec = pl.BlockSpec((1, E), lambda i: (0, 0),
                                  pipeline_mode=pl.Buffered(1))
        else:
            w_spec = pl.BlockSpec((K_pad, E), lambda i: (0, 0))
            b_spec = pl.BlockSpec((1, E), lambda i: (0, 0))
        return pl.pallas_call(
            _patch_embed_matmul_kernel,
            out_shape=jax.ShapeDtypeStruct((M, E), out_dtype),
            grid_spec=pltpu.PrefetchScalarGridSpec(
                num_scalar_prefetch=0,
                grid=(num_tiles,),
                in_specs=[
                    pl.BlockSpec((tm, K_pad), lambda i: (i, 0)),   # streamed rows
                    w_spec,                                        # resident weight
                    b_spec,                                        # resident bias
                ],
                out_specs=pl.BlockSpec((tm, E), lambda i: (i, 0)), # lane-dense output
            ),
            compiler_params=compiler_params,
            cost_estimate=cost,
        )

    try:
        out = build(True)(patches, w_t, b2)
    except Exception:
        # pl.Buffered(1) single-buffering is an optimization only; fall back to
        # default double-buffering if this JAX build rejects pipeline_mode.
        out = build(False)(patches, w_t, b2)

    return out.reshape(B, N, E)


# ---------------- pure-JAX reference (mirrors the PyTorch forward) ----------------
def patch_embed_ref(x, weight, bias, *, tubelet_size, patch_size):
    ts = int(tubelet_size)
    ph, pw = patch_size
    out = jax.lax.conv_general_dilated(
        x.astype(jnp.float32), weight.astype(jnp.float32),
        window_strides=(ts, ph, pw), padding="VALID",
        dimension_numbers=("NCDHW", "OIDHW", "NCDHW"),
        precision=jax.lax.Precision.HIGHEST)
    out = out + bias.astype(jnp.float32)[None, :, None, None, None]
    B, E = out.shape[0], out.shape[1]
    out = out.reshape(B, E, -1).transpose(0, 2, 1)   # flatten(2).transpose(1, 2)
    return out.astype(x.dtype)


if __name__ == "__main__":
    # Small shapes consistent with the module: img_size=16, patch_size=8,
    # in_chans=3, embed_dim=128, num_frames=8, tubelet_size=2
    #   -> N = (8/2)*(16/8)*(16/8) = 16 patches/sample, K = 3*2*8*8 = 384, E = 128.
    B, C, T, H, W = 2, 3, 8, 16, 16
    embed_dim, tubelet, patch = 128, 2, (8, 8)

    key = jax.random.PRNGKey(0)
    kx, kw, kb = jax.random.split(key, 3)
    x = jax.random.normal(kx, (B, C, T, H, W), jnp.float32)
    w = jax.random.normal(kw, (embed_dim, C, tubelet, patch[0], patch[1]),
                          jnp.float32) * 0.02
    b = jax.random.normal(kb, (embed_dim,), jnp.float32) * 0.02

    ref = patch_embed_ref(x, w, b, tubelet_size=tubelet, patch_size=patch)

    # Default path: compute dtype = activation dtype (f32 here).
    out = jax.block_until_ready(
        patch_embed_forward(x, w, b, tubelet_size=tubelet, patch_size=patch))
    np.testing.assert_allclose(np.asarray(out), np.asarray(ref), rtol=1e-3, atol=1e-3)

    # bf16 MXU path (the recommended setting on v7x, whose MXU is bf16/fp8-only).
    out_bf16 = jax.block_until_ready(
        patch_embed_forward(x, w, b, tubelet_size=tubelet, patch_size=patch,
                            compute_dtype=jnp.bfloat16))
    np.testing.assert_allclose(np.asarray(out_bf16), np.asarray(ref),
                               rtol=3e-2, atol=3e-2)

    print("KERNEL_OK")
</pallas_src>

<mosaic_0001>
module attributes {stable_mosaic.version = 11 : i64} {
  func.func @_patch_embed_matmul_kernel(%arg0: i32, %arg1: memref<16x384xf32, #tpu.memory_space<vmem>>, %arg2: memref<384x128xf32, #tpu.memory_space<vmem>>, %arg3: memref<1x128xf32, #tpu.memory_space<vmem>>, %arg4: memref<16x128xf32, #tpu.memory_space<vmem>>) attributes {dimension_semantics = [#tpu.dimension_semantics<parallel>], iteration_bounds = array<i64: 2>, scalar_prefetch = 0 : i64, scratch_operands = 0 : i64, tpu.core_type = #tpu.core_type<tc>, window_params = [{transform_indices = @transform_0, window_bounds = array<i64: 16, 384>}, {pipeline_mode = #tpu.pipeline_mode<synchronous>, transform_indices = @transform_1, window_bounds = array<i64: 384, 128>}, {pipeline_mode = #tpu.pipeline_mode<synchronous>, transform_indices = @transform_2, window_bounds = array<i64: 1, 128>}, {transform_indices = @transform_3, window_bounds = array<i64: 16, 128>}]} {
    %c0 = arith.constant 0 : index
    %c0_0 = arith.constant 0 : index
    %0 = vector.load %arg1[%c0, %c0_0] : memref<16x384xf32, #tpu.memory_space<vmem>>, vector<16x384xf32>
    %c0_1 = arith.constant 0 : index
    %c0_2 = arith.constant 0 : index
    %1 = vector.load %arg2[%c0_1, %c0_2] : memref<384x128xf32, #tpu.memory_space<vmem>>, vector<384x128xf32>
    %cst = arith.constant dense<0.000000e+00> : vector<16x128xf32>
    %2 = tpu.matmul %0, %1, %cst {dimension_numbers = #tpu.dot_dimension_numbers<[1], [0], [0], [1], [0, 0, 1, 1], [], []>} : vector<16x384xf32>, vector<384x128xf32>, vector<16x128xf32> -> vector<16x128xf32>
    %c0_3 = arith.constant 0 : index
    %c0_4 = arith.constant 0 : index
    %3 = vector.load %arg3[%c0_3, %c0_4] : memref<1x128xf32, #tpu.memory_space<vmem>>, vector<1x128xf32>
    %4 = vector.broadcast %3 : vector<1x128xf32> to vector<16x128xf32>
    %5 = arith.addf %2, %4 : vector<16x128xf32>
    %c0_5 = arith.constant 0 : index
    %c0_6 = arith.constant 0 : index
    %6 = vector.load %arg4[%c0_5, %c0_6] : memref<16x128xf32, #tpu.memory_space<vmem>>, vector<16x128xf32>
    tpu.vector_store %arg4[%c0_5, %c0_6], %5 {strides = array<i32>} : memref<16x128xf32, #tpu.memory_space<vmem>>, vector<16x128xf32>,
    return
  }
  func.func @transform_0(%arg0: i32) -> (i32, i32) {
    %c0_i32 = arith.constant 0 : i32
    %c0_i32_0 = arith.constant 0 : i32
    return %arg0, %c0_i32 : i32, i32
  }
  func.func @transform_1(%arg0: i32) -> (i32, i32) {
    %c0_i32 = arith.constant 0 : i32
    %c0_i32_0 = arith.constant 0 : i32
    %c0_i32_1 = arith.constant 0 : i32
    return %c0_i32, %c0_i32_0 : i32, i32
  }
  func.func @transform_2(%arg0: i32) -> (i32, i32) {
    %c0_i32 = arith.constant 0 : i32
    %c0_i32_0 = arith.constant 0 : i32
    %c0_i32_1 = arith.constant 0 : i32
    return %c0_i32, %c0_i32_0 : i32, i32
  }
  func.func @transform_3(%arg0: i32) -> (i32, i32) {
    %c0_i32 = arith.constant 0 : i32
    %c0_i32_0 = arith.constant 0 : i32
    return %arg0, %c0_i32 : i32, i32
  }
}

module attributes {stable_mosaic.version = 11 : i64} {
  func.func @_patch_embed_matmul_kernel(%arg0: i32, %arg1: memref<16x384xf32, #tpu.memory_space<vmem>>, %arg2: memref<384x128xf32, #tpu.memory_space<vmem>>, %arg3: memref<1x128xf32, #tpu.memory_space<vmem>>, %arg4: memref<16x128xf32, #tpu.memory_space<vmem>>) attributes {dimension_semantics = [#tpu.dimension_semantics<parallel>], iteration_bounds = array<i64: 2>, scalar_prefetch = 0 : i64, scratch_operands = 0 : i64, tpu.core_type = #tpu.core_type<tc>, window_params = [{transform_indices = @transform_0, window_bounds = array<i64: 16, 384>}, {pipeline_mode = #tpu.pipeline_mode<synchronous>, transform_indices = @transform_1, window_bounds = array<i64: 384, 128>}, {pipeline_mode = #tpu.pipeline_mode<synchronous>, transform_indices = @transform_2, window_bounds = array<i64: 1, 128>}, {transform_indices = @transform_3, window_bounds = array<i64: 16, 128>}]} {
    %c0 = arith.constant 0 : index
    %c0_0 = arith.constant 0 : index
    %0 = vector.load %arg1[%c0, %c0_0] : memref<16x384xf32, #tpu.memory_space<vmem>>, vector<16x384xf32>
    %c0_1 = arith.constant 0 : index
    %c0_2 = arith.constant 0 : index
    %1 = vector.load %arg2[%c0_1, %c0_2] : memref<384x128xf32, #tpu.memory_space<vmem>>, vector<384x128xf32>
    %cst = arith.constant dense<0.000000e+00> : vector<16x128xf32>
    %2 = tpu.matmul %0, %1, %cst {dimension_numbers = #tpu.dot_dimension_numbers<[1], [0], [0], [1], [0, 0, 1, 1], [], []>} : vector<16x384xf32>, vector<384x128xf32>, vector<16x128xf32> -> vector<16x128xf32>
    %c0_3 = arith.constant 0 : index
    %c0_4 = arith.constant 0 : index
    %3 = vector.load %arg3[%c0_3, %c0_4] : memref<1x128xf32, #tpu.memory_space<vmem>>, vector<1x128xf32>
    %4 = vector.broadcast %3 : vector<1x128xf32> to vector<16x128xf32>
    %5 = arith.addf %2, %4 : vector<16x128xf32>
    %c0_5 = arith.constant 0 : index
    %c0_6 = arith.constant 0 : index
    %6 = vector.load %arg4[%c0_5, %c0_6] : memref<16x128xf32, #tpu.memory_space<vmem>>, vector<16x128xf32>
    tpu.vector_store %arg4[%c0_5, %c0_6], %5 {strides = array<i32>} : memref<16x128xf32, #tpu.memory_space<vmem>>, vector<16x128xf32>,
    return
  }
  func.func @transform_0(%arg0: i32) -> (i32, i32) {
    %c0_i32 = arith.constant 0 : i32
    %c0_i32_0 = arith.constant 0 : i32
    return %arg0, %c0_i32 : i32, i32
  }
  func.func @transform_1(%arg0: i32) -> (i32, i32) {
    %c0_i32 = arith.constant 0 : i32
    %c0_i32_0 = arith.constant 0 : i32
    %c0_i32_1 = arith.constant 0 : i32
    return %c0_i32, %c0_i32_0 : i32, i32
  }
  func.func @transform_2(%arg0: i32) -> (i32, i32) {
    %c0_i32 = arith.constant 0 : i32
    %c0_i32_0 = arith.constant 0 : i32
    %c0_i32_1 = arith.constant 0 : i32
    return %c0_i32, %c0_i32_0 : i32, i32
  }
  func.func @transform_3(%arg0: i32) -> (i32, i32) {
    %c0_i32 = arith.constant 0 : i32
    %c0_i32_0 = arith.constant 0 : i32
    return %arg0, %c0_i32 : i32, i32
  }
}

</mosaic_0001>

<llo_original>
// kernel: tpu_custom_call.1
$region0: #{tpu_custom_call.1}
  #allocation0 [shape = 'u32[]', space=smem, size = 0x4, offset = 0x4, fixed_abs, tag = 'smem constant byte address 0x4 - core index']
  #allocation1 [shape = 'u32[144,128]{1,0:T(1,128)}', space=vmem, size = 0x12000, scoped, tag = 'internal scratch']
  %s0 = inlined_call_operand.hbm [shape: f32[32,384], index: 0, kind: input, shape index: {}]
  %s1 = inlined_call_operand.hbm [shape: f32[384,128], index: 1, kind: input, shape index: {}]
  %s2 = inlined_call_operand.vmem [shape: f32[1,128], index: 2, kind: input, shape index: {}]
  %s3 = inlined_call_operand.hbm [shape: f32[32,128], index: 3, kind: output, shape index: {}]
  %s4 = sld [smem:[#allocation0]]
  $region53: #{tpu_custom_call.1} parent=0
    _
  %s6 = ssub.s32 1, %s4
  %s7 = scalar_select 0, %s6, %s4
  $region1: #{tpu_custom_call.1} parent=0
    #allocation2 [shape = 'u8[49152]{0}', space=vmem, size = 0xc000, scoped, tag = 'input window, operand 0']
    #allocation3 [shape = 's32[2]{0}', space=sflag, size = 0x8, scoped, tag = 'scoped memory for tpu_custom_call.1']
    #allocation4 [shape = 's32[2]{0}', space=sflag, size = 0x8, scoped, tag = 'scoped memory for tpu_custom_call.1']
    #allocation5 [shape = 'u8[196608]{0}', space=vmem, size = 0x30000, scoped, tag = 'input window, operand 1, single buffered']
    #allocation6 [shape = 's32[1]{0}', space=sflag, size = 0x4, scoped, tag = 'scoped memory for tpu_custom_call.1']
    #allocation7 [shape = 'u8[16384]{0}', space=vmem, size = 0x4000, scoped, tag = 'output window, operand 0']
    %8 = vsyncpa [#allocation3], 0
    %s9 = scalar_lea.sflag [#allocation3], 1
    %10 = vsyncpa %s9, 0
    %11 = vsyncpa [#allocation6], 0
    %12 = vsyncpa [#allocation4], 0
    %s13 = scalar_lea.sflag [#allocation4], 1
    %14 = vsyncpa %s13, 0
    loop: start=0, step=1, limit=4
    $region2: #{tpu_custom_call.1} parent=1 // loop_pre_header
      _
    $region3: #{tpu_custom_call.1} parent=1 // loop_header
      %s16 = sphi 0, %s20
      %p17 = scmp.ge.s32.totalorder %s16, 4
      %s26 = sphi 0, %s28
      %s29 = sphi 0, %s26
      %s30 = sphi 0, %s29
      %s46 = sphi 0, %s30
      %s50 = sphi 0, %s50
      %s52 = sphi 0, %s50
      %s53 = sphi 0, %s52
      %s67 = sphi 0, %s53
      %s71 = sphi 0, %s71
      %s73 = sphi 0, %s71
      %s74 = sphi 0, %s73
      %s88 = sphi 0, %s74
      %s94 = sphi 0, %s96
      %s97 = sphi 0, %s94
      %s98 = sphi 0, %s97
      %s114 = sphi 0, %s98
    $region4: #{tpu_custom_call.1} parent=1 // loop_header_branch
      %19 = sbr.rel (%p17) target = $region8
    $region5: #{tpu_custom_call.1} parent=1 // loop_body
      %s21 = ssub.s32 %s16, 1
      %s22 = ssub.s32 %s16, 2
      %s23 = sadd.s32 %s16, 1
      %s24 = ssub.s32 %s16, %s23
      %p25 = scmp.eq.s32.totalorder %s24, 0
      %s27 = sadd.s32 %s26, 1
      %s28 = scalar_select %p25, %s26, %s27
      %p31 = pneg %p25
      %p32 = scmp.eq.s32.totalorder %s16, 1
      %p33 = por %p31, %p32
      %p34 = scmp.ne.s32.totalorder %s26, %s29
      %p35 = scmp.eq.s32.totalorder %s16, 0
      %p36 = por %p34, %p35
      %p37 = scmp.ne.s32.totalorder %s26, %s29
      %p38 = scmp.eq.s32.totalorder %s21, 1
      %p39 = por %p37, %p38
      %p40 = scmp.ne.s32.totalorder %s29, %s30
      %p41 = scmp.eq.s32.totalorder %s21, 0
      %p42 = por %p40, %p41
      %p43 = scmp.ne.s32.totalorder %s29, %s30
      %p44 = scmp.eq.s32.totalorder %s22, 1
      %p45 = por %p43, %p44
      %p47 = scmp.ne.s32.totalorder %s30, %s46
      %p48 = scmp.eq.s32.totalorder %s22, 0
      %p49 = por %p47, %p48
      %s51 = sadd.s32 %s50, 1
      %p54 = scmp.eq.s32.totalorder %s16, 1
      %p55 = scmp.ne.s32.totalorder %s50, %s52
      %p56 = scmp.eq.s32.totalorder %s16, 0
      %p57 = por %p55, %p56
      %p58 = scmp.ne.s32.totalorder %s50, %s52
      %p59 = scmp.eq.s32.totalorder %s21, 1
      %p60 = por %p58, %p59
      %p61 = scmp.ne.s32.totalorder %s52, %s53
      %p62 = scmp.eq.s32.totalorder %s21, 0
      %p63 = por %p61, %p62
      %p64 = scmp.ne.s32.totalorder %s52, %s53
      %p65 = scmp.eq.s32.totalorder %s22, 1
      %p66 = por %p64, %p65
      %p68 = scmp.ne.s32.totalorder %s53, %s67
      %p69 = scmp.eq.s32.totalorder %s22, 0
      %p70 = por %p68, %p69
      %s72 = sadd.s32 %s71, 1
      %p75 = scmp.eq.s32.totalorder %s16, 1
      %p76 = scmp.ne.s32.totalorder %s71, %s73
      %p77 = scmp.eq.s32.totalorder %s16, 0
      %p78 = por %p76, %p77
      %p79 = scmp.ne.s32.totalorder %s71, %s73
      %p80 = scmp.eq.s32.totalorder %s21, 1
      %p81 = por %p79, %p80
      %p82 = scmp.ne.s32.totalorder %s73, %s74
      %p83 = scmp.eq.s32.totalorder %s21, 0
      %p84 = por %p82, %p83
      %p85 = scmp.ne.s32.totalorder %s73, %s74
      %p86 = scmp.eq.s32.totalorder %s22, 1
      %p87 = por %p85, %p86
      %p89 = scmp.ne.s32.totalorder %s74, %s88
      %p90 = scmp.eq.s32.totalorder %s22, 0
      %p91 = por %p89, %p90
      %s92 = ssub.s32 %s16, %s23
      %p93 = scmp.eq.s32.totalorder %s92, 0
      %s95 = sadd.s32 %s94, 1
      %s96 = scalar_select %p93, %s94, %s95
      %p99 = pneg %p93
      %p100 = scmp.eq.s32.totalorder %s16, 1
      %p101 = por %p99, %p100
      %p102 = scmp.ne.s32.totalorder %s94, %s97
      %p103 = scmp.eq.s32.totalorder %s16, 0
      %p104 = por %p102, %p103
      %p105 = scmp.ne.s32.totalorder %s94, %s97
      %p106 = scmp.eq.s32.totalorder %s21, 1
      %p107 = por %p105, %p106
      %p108 = scmp.ne.s32.totalorder %s97, %s98
      %p109 = scmp.eq.s32.totalorder %s21, 0
      %p110 = por %p108, %p109
      %p111 = scmp.ne.s32.totalorder %s97, %s98
      %p112 = scmp.eq.s32.totalorder %s22, 1
      %p113 = por %p111, %p112
      %p115 = scmp.ne.s32.totalorder %s98, %s114
      %p116 = scmp.eq.s32.totalorder %s22, 0
      %p117 = por %p115, %p116
      %p118 = scmp.le.s32.totalorder 1, %s16
      %p119 = scmp.lt.s32.totalorder %s16, 3
      %p120 = pnand %p118, %p119
      %p121 = pneg %p120
      // Predicated region
      $region9: #{tpu_custom_call.1} parent=5 // pred_check
        _
      $region10: #{tpu_custom_call.1} parent=5 // pred_check_branch
        %123 = sbr.rel (%p120) target = $region12
      $region11: #{tpu_custom_call.1} parent=5 // pred_region
        %s124 = ssub.s32 %s16, 1
        // Predicated region
        $region13: #{tpu_custom_call.1} parent=11 // pred_check
          %p125 = pneg %p63
        $region14: #{tpu_custom_call.1} parent=11 // pred_check_branch
          %127 = sbr.rel (%p125) target = $region16
        $region15: #{tpu_custom_call.1} parent=11 // pred_region
          %s129 = ssub.s32 6144, 6144
          %130 = vsyncadd [#allocation6], %s129
          %s131 = sshll.u32 [#allocation5], 4
          %s132 = int_to_ptr.vmem [resolvable:$true] %s131
          %137 = dma.hbm_to_vmem [thread:$0]  %s1, 6144, %s132, [#allocation6], 128, 128, 8
        $region16: #{tpu_custom_call.1} parent=11 // pred_fallthru
          _
        // Predicated region
        $region17: #{tpu_custom_call.1} parent=11 // pred_check
          %p138 = pneg %p84
        $region18: #{tpu_custom_call.1} parent=11 // pred_check_branch
          %140 = sbr.rel (%p138) target = $region20
        $region19: #{tpu_custom_call.1} parent=11 // pred_region
          _
        $region20: #{tpu_custom_call.1} parent=11 // pred_fallthru
          _
      $region12: #{tpu_custom_call.1} parent=5 // pred_fallthru
        _
      %p141 = scmp.lt.s32.totalorder %s16, 2
      // Predicated region
      $region21: #{tpu_custom_call.1} parent=5 // pred_check
        %p142 = pneg %p141
      $region22: #{tpu_custom_call.1} parent=5 // pred_check_branch
        %144 = sbr.rel (%p142) target = $region24
      $region23: #{tpu_custom_call.1} parent=5 // pred_region
        // Predicated region
        $region25: #{tpu_custom_call.1} parent=23 // pred_check
          %p145 = pneg %p36
        $region26: #{tpu_custom_call.1} parent=23 // pred_check_branch
          %147 = sbr.rel (%p145) target = $region28
        $region27: #{tpu_custom_call.1} parent=23 // pred_region
          %s148 = sand.u32 %s26, 1
          %s149 = scalar_lea.sflag [#allocation3], %s148
          %s150 = sand.u32 %s26, 1
          %s151 = smul.addr %s150, 48
          %s152 = scalar_lea.vmem [#allocation2], %s151
          %s153 = smul.u32 2, %s16
          %s155 = ssub.s32 768, 768
          %156 = vsyncadd %s149, %s155
          %s157 = smul.addr %s153, 3
          %s158 = smul.addr %s157, 128
          %s159 = scalar_lea.hbm %s0, %s158
          %s160 = sshll.u32 %s152, 4
          %s161 = int_to_ptr.vmem [resolvable:$true] %s160
          %166 = dma.hbm_to_vmem [thread:$0]  %s159, 768, %s161, %s149, 384, 384, 24
        $region28: #{tpu_custom_call.1} parent=23 // pred_fallthru
          _
      $region24: #{tpu_custom_call.1} parent=5 // pred_fallthru
        _
      %p167 = scmp.le.s32.totalorder 1, %s16
      %p168 = scmp.lt.s32.totalorder %s16, 3
      %p169 = pnand %p167, %p168
      %p170 = pneg %p169
      // Predicated region
      $region29: #{tpu_custom_call.1} parent=5 // pred_check
        _
      $region30: #{tpu_custom_call.1} parent=5 // pred_check_branch
        %172 = sbr.rel (%p169) target = $region32
      $region31: #{tpu_custom_call.1} parent=5 // pred_region
        %s173 = ssub.s32 %s16, 1
        %s174 = sand.u32 %s29, 1
        %s175 = scalar_lea.sflag [#allocation3], %s174
        %s176 = sand.u32 %s29, 1
        %s177 = smul.addr %s176, 48
        %s178 = scalar_lea.vmem [#allocation2], %s177
        // Predicated region
        $region33: #{tpu_custom_call.1} parent=31 // pred_check
          %p179 = pneg %p42
        $region34: #{tpu_custom_call.1} parent=31 // pred_check_branch
          %181 = sbr.rel (%p179) target = $region36
        $region35: #{tpu_custom_call.1} parent=31 // pred_region
          %182 = dma.done %s175, 768
        $region36: #{tpu_custom_call.1} parent=31 // pred_fallthru
          _
        // Predicated region
        $region37: #{tpu_custom_call.1} parent=31 // pred_check
          %p183 = pneg %p63
        $region38: #{tpu_custom_call.1} parent=31 // pred_check_branch
          %185 = sbr.rel (%p183) target = $region40
        $region39: #{tpu_custom_call.1} parent=31 // pred_region
          %186 = dma.done [#allocation6], 6144
        $region40: #{tpu_custom_call.1} parent=31 // pred_fallthru
          _
        %s187 = sand.u32 %s29, 1
        %s188 = scalar_lea.sflag [#allocation3], %s187
        %s189 = sand.u32 %s29, 1
        %s190 = smul.addr %s189, 48
        %s191 = scalar_lea.vmem [#allocation2], %s190
        %p192 = pneg %p42
        %p193 = pneg %p39
        %p194 = pneg %p63
        %p195 = pneg %p60
        %p196 = pneg %p84
        %p197 = pneg %p81
        %p198 = pneg %p110
        %p199 = pneg %p107
        %s200 = sand.u32 %s97, 1
        %s201 = scalar_lea.sflag [#allocation4], %s200
        %s202 = sand.u32 %s97, 1
        %s203 = smul.addr %s202, 16
        %s204 = scalar_lea.vmem [#allocation7], %s203
        %s205 = smul.u32 2, %s21
        %s206 = smul.u32 2, %s21
        %v207 = vld [vmem:[%s178] sm:$0xff]
        %v208 = vld [vmem:[%s178 + $0x8] sm:$0xff]
        %v209 = vld [vmem:[%s178 + $0x10] sm:$0xff]
        %v210 = vld [vmem:[%s178 + $0x18] sm:$0xff]
        %v211 = vld [vmem:[%s178 + $0x20] sm:$0xff]
        %v212 = vld [vmem:[%s178 + $0x28] sm:$0xff]
        %v213 = vld [vmem:[#allocation5] sm:$0xff]
        %v214 = vld [vmem:[#allocation5 + $0x8] sm:$0xff]
        %v215 = vld [vmem:[#allocation5 + $0x10] sm:$0xff]
        %v216 = vld [vmem:[#allocation5 + $0x18] sm:$0xff]
        %v217 = vld [vmem:[#allocation5 + $0x20] sm:$0xff]
        %v218 = vld [vmem:[#allocation5 + $0x28] sm:$0xff]
        %v219 = vld [vmem:[#allocation5 + $0x30] sm:$0xff]
        %v220 = vld [vmem:[#allocation5 + $0x38] sm:$0xff]
        %v221 = vld [vmem:[#allocation5 + $0x40] sm:$0xff]
        %v222 = vld [vmem:[#allocation5 + $0x48] sm:$0xff]
        %v223 = vld [vmem:[#allocation5 + $0x50] sm:$0xff]
        %v224 = vld [vmem:[#allocation5 + $0x58] sm:$0xff]
        %v225 = vld [vmem:[#allocation5 + $0x60] sm:$0xff]
        %v226 = vld [vmem:[#allocation5 + $0x68] sm:$0xff]
        %v227 = vld [vmem:[#allocation5 + $0x70] sm:$0xff]
        %v228 = vld [vmem:[#allocation5 + $0x78] sm:$0xff]
        %v229 = vld [vmem:[#allocation5 + $0x80] sm:$0xff]
        %v230 = vld [vmem:[#allocation5 + $0x88] sm:$0xff]
        %v231 = vld [vmem:[#allocation5 + $0x90] sm:$0xff]
        %v232 = vld [vmem:[#allocation5 + $0x98] sm:$0xff]
        %v233 = vld [vmem:[#allocation5 + $0xa0] sm:$0xff]
        %v234 = vld [vmem:[#allocation5 + $0xa8] sm:$0xff]
        %v235 = vld [vmem:[#allocation5 + $0xb0] sm:$0xff]
        %v236 = vld [vmem:[#allocation5 + $0xb8] sm:$0xff]
        %v237 = vld [vmem:[#allocation5 + $0xc0] sm:$0xff]
        %v238 = vld [vmem:[#allocation5 + $0xc8] sm:$0xff]
        %v239 = vld [vmem:[#allocation5 + $0xd0] sm:$0xff]
        %v240 = vld [vmem:[#allocation5 + $0xd8] sm:$0xff]
        %v241 = vld [vmem:[#allocation5 + $0xe0] sm:$0xff]
        %v242 = vld [vmem:[#allocation5 + $0xe8] sm:$0xff]
        %v243 = vld [vmem:[#allocation5 + $0xf0] sm:$0xff]
        %v244 = vld [vmem:[#allocation5 + $0xf8] sm:$0xff]
        %v245 = vld [vmem:[#allocation5 + $0x100] sm:$0xff]
        %v246 = vld [vmem:[#allocation5 + $0x108] sm:$0xff]
        %v247 = vld [vmem:[#allocation5 + $0x110] sm:$0xff]
        %v248 = vld [vmem:[#allocation5 + $0x118] sm:$0xff]
        %v249 = vld [vmem:[#allocation5 + $0x120] sm:$0xff]
        %v250 = vld [vmem:[#allocation5 + $0x128] sm:$0xff]
        %v251 = vld [vmem:[#allocation5 + $0x130] sm:$0xff]
        %v252 = vld [vmem:[#allocation5 + $0x138] sm:$0xff]
        %v253 = vld [vmem:[#allocation5 + $0x140] sm:$0xff]
        %v254 = vld [vmem:[#allocation5 + $0x148] sm:$0xff]
        %v255 = vld [vmem:[#allocation5 + $0x150] sm:$0xff]
        %v256 = vld [vmem:[#allocation5 + $0x158] sm:$0xff]
        %v257 = vld [vmem:[#allocation5 + $0x160] sm:$0xff]
        %v258 = vld [vmem:[#allocation5 + $0x168] sm:$0xff]
        %v259 = vld [vmem:[#allocation5 + $0x170] sm:$0xff]
        %v260 = vld [vmem:[#allocation5 + $0x178] sm:$0xff]
        %v261 = vld [vmem:[%s2] sm:$0x1]
        %v263 = vlaneseq
        %v264 = vshrl.u32 %v263, 7
        %v265 = vsub.s32 0, %v264
        %v266 = vrot.slane %v261, %v265
        %268 = vmatprep.subr.mxu0 0.0
        %269 = vmatpush1.msra.mxu0 %v213
        %270 = vmatprep.subr.mxu0 0.0
        %271 = vmatpush1.msra.mxu0 %v214
        %272 = vmatprep.subr.mxu0 0.0
        %273 = vmatpush1.msra.mxu0 %v215
        %274 = vmatprep.subr.mxu0 0.0
        %275 = vmatpush1.msra.mxu0 %v216
        %276 = vmatprep.subr.mxu0 0.0
        %277 = vmatpush1.msra.mxu0 %v217
        %278 = vmatprep.subr.mxu0 0.0
        %279 = vmatpush1.msra.mxu0 %v218
        %280 = vmatprep.subr.mxu0 0.0
        %281 = vmatpush1.msra.mxu0 %v219
        %282 = vmatprep.subr.mxu0 0.0
        %283 = vmatpush1.msra.mxu0 %v220
        %284 = vmatprep.subr.mxu0 0.0
        %285 = vmatpush1.msra.mxu0 %v221
        %286 = vmatprep.subr.mxu0 0.0
        %287 = vmatpush1.msra.mxu0 %v222
        %288 = vmatprep.subr.mxu0 0.0
        %289 = vmatpush1.msra.mxu0 %v223
        %290 = vmatprep.subr.mxu0 0.0
        %291 = vmatpush1.msra.mxu0 %v224
        %292 = vmatprep.subr.mxu0 0.0
        %293 = vmatpush1.msra.mxu0 %v225
        %294 = vmatprep.subr.mxu0 0.0
        %295 = vmatpush1.msra.mxu0 %v226
        %296 = vmatprep.subr.mxu0 0.0
        %297 = vmatpush1.msra.mxu0 %v227
        %298 = vmatprep.subr.mxu0 0.0
        %299 = vmatpush1.msra.mxu0 %v228
        %300 = vmatprep.subr.mxu0 0.0
        %301 = vmatpush1.msra.mxu0 %v229
        %302 = vmatprep.subr.mxu0 0.0
        %303 = vmatpush1.msra.mxu0 %v230
        %304 = vmatprep.subr.mxu0 0.0
        %305 = vmatpush1.msra.mxu0 %v231
        %306 = vmatprep.subr.mxu0 0.0
        %307 = vmatpush1.msra.mxu0 %v232
        %308 = vmatprep.subr.mxu0 0.0
        %309 = vmatpush1.msra.mxu0 %v233
        %310 = vmatprep.subr.mxu0 0.0
        %311 = vmatpush1.msra.mxu0 %v234
        %312 = vmatprep.subr.mxu0 0.0
        %313 = vmatpush1.msra.mxu0 %v235
        %314 = vmatprep.subr.mxu0 0.0
        %315 = vmatpush1.msra.mxu0 %v236
        %316 = vmatprep.subr.mxu0 0.0
        %317 = vmatpush1.msra.mxu0 %v237
        %318 = vmatprep.subr.mxu0 0.0
        %319 = vmatpush1.msra.mxu0 %v238
        %320 = vmatprep.subr.mxu0 0.0
        %321 = vmatpush1.msra.mxu0 %v239
        %322 = vmatprep.subr.mxu0 0.0
        %323 = vmatpush1.msra.mxu0 %v240
        %324 = vmatprep.subr.mxu0 0.0
        %325 = vmatpush1.msra.mxu0 %v241
        %326 = vmatprep.subr.mxu0 0.0
        %327 = vmatpush1.msra.mxu0 %v242
        %328 = vmatprep.subr.mxu0 0.0
        %329 = vmatpush1.msra.mxu0 %v243
        %330 = vmatprep.subr.mxu0 0.0
        %331 = vmatpush1.msra.mxu0 %v244
        %332 = vmatprep.mubr.f32.mxu0 %v208
        %333 = vmatmul.mubr.f32.gmra.mrb[0].mxu0 %v207
        %v334 = vpop.f32.mrb[0].mxu0
        %v335 = vadd.f32 %v266, %v334
        %v336 = vpop.f32.mrb[0].mxu0
        %337 = vmatprep.mubr.f32.mxu0 %v211
        %338 = vmatmul.mubr.f32.gmra.mrb[0].mxu0 %v210
        %v339 = vpop.f32.mrb[0].mxu0
        %v340 = vadd.f32 %v266, %v339
        %v341 = vpop.f32.mrb[0].mxu0
        %342 = vdwg.mxu0
        %343 = vmatprep.subr.mxu0 0.0
        %344 = vmatpush1.msra.mxu0 %v245
        %345 = vmatprep.subr.mxu0 0.0
        %346 = vmatpush1.msra.mxu0 %v246
        %347 = vmatprep.subr.mxu0 0.0
        %348 = vmatpush1.msra.mxu0 %v247
        %349 = vmatprep.subr.mxu0 0.0
        %350 = vmatpush1.msra.mxu0 %v248
        %351 = vmatprep.subr.mxu0 0.0
        %352 = vmatpush1.msra.mxu0 %v249
        %353 = vmatprep.subr.mxu0 0.0
        %354 = vmatpush1.msra.mxu0 %v250
        %355 = vmatprep.subr.mxu0 0.0
        %356 = vmatpush1.msra.mxu0 %v251
        %357 = vmatprep.subr.mxu0 0.0
        %358 = vmatpush1.msra.mxu0 %v252
        %359 = vmatprep.subr.mxu0 0.0
        %360 = vmatpush1.msra.mxu0 %v253
        %361 = vmatprep.subr.mxu0 0.0
        %362 = vmatpush1.msra.mxu0 %v254
        %363 = vmatprep.subr.mxu0 0.0
        %364 = vmatpush1.msra.mxu0 %v255
        %365 = vmatprep.subr.mxu0 0.0
        %366 = vmatpush1.msra.mxu0 %v256
        %367 = vmatprep.subr.mxu0 0.0
        %368 = vmatpush1.msra.mxu0 %v257
        %369 = vmatprep.subr.mxu0 0.0
        %370 = vmatpush1.msra.mxu0 %v258
        %371 = vmatprep.subr.mxu0 0.0
        %372 = vmatpush1.msra.mxu0 %v259
        %373 = vmatprep.subr.mxu0 0.0
        %374 = vmatpush1.msra.mxu0 %v260
        %375 = vmatprep.subr.mxu0 0.0
        %376 = vmatpush1.msra.mxu0 0.0
        %377 = vmatprep.subr.mxu0 0.0
        %378 = vmatpush1.msra.mxu0 0.0
        %379 = vmatprep.subr.mxu0 0.0
        %380 = vmatpush1.msra.mxu0 0.0
        %381 = vmatprep.subr.mxu0 0.0
        %382 = vmatpush1.msra.mxu0 0.0
        %383 = vmatprep.subr.mxu0 0.0
        %384 = vmatpush1.msra.mxu0 0.0
        %385 = vmatprep.subr.mxu0 0.0
        %386 = vmatpush1.msra.mxu0 0.0
        %387 = vmatprep.subr.mxu0 0.0
        %388 = vmatpush1.msra.mxu0 0.0
        %389 = vmatprep.subr.mxu0 0.0
        %390 = vmatpush1.msra.mxu0 0.0
        %391 = vmatprep.subr.mxu0 0.0
        %392 = vmatpush1.msra.mxu0 0.0
        %393 = vmatprep.subr.mxu0 0.0
        %394 = vmatpush1.msra.mxu0 0.0
        %395 = vmatprep.subr.mxu0 0.0
        %396 = vmatpush1.msra.mxu0 0.0
        %397 = vmatprep.subr.mxu0 0.0
        %398 = vmatpush1.msra.mxu0 0.0
        %399 = vmatprep.subr.mxu0 0.0
        %400 = vmatpush1.msra.mxu0 0.0
        %401 = vmatprep.subr.mxu0 0.0
        %402 = vmatpush1.msra.mxu0 0.0
        %403 = vmatprep.subr.mxu0 0.0
        %404 = vmatpush1.msra.mxu0 0.0
        %405 = vmatprep.subr.mxu0 0.0
        %406 = vmatpush1.msra.mxu0 0.0
        %407 = vmatprep.mubr.f32.mxu0 0.0
        %408 = vmatmul.mubr.f32.gmra.mrb[0].mxu0 %v209
        %v409 = vpop.f32.mrb[0].mxu0
        %v410 = vadd.f32 %v335, %v409
        %v411 = vpop.f32.mrb[0].mxu0
        %412 = vmatprep.mubr.f32.mxu0 0.0
        %413 = vmatmul.mubr.f32.gmra.mrb[0].mxu0 %v212
        %v414 = vpop.f32.mrb[0].mxu0
        %v415 = vadd.f32 %v340, %v414
        %v416 = vpop.f32.mrb[0].mxu0
        %417 = vdwg.mxu0
        %418 = vst [vmem:[%s204] sm:$0xff] %v410
        %419 = vst [vmem:[%s204 + $0x8] sm:$0xff] %v415
        %s420 = sand.u32 %s97, 1
        %s421 = scalar_lea.sflag [#allocation4], %s420
        %s422 = sand.u32 %s97, 1
        %s423 = smul.addr %s422, 16
        %s424 = scalar_lea.vmem [#allocation7], %s423
        // Predicated region
        $region41: #{tpu_custom_call.1} parent=31 // pred_check
          %p425 = pneg %p107
        $region42: #{tpu_custom_call.1} parent=31 // pred_check_branch
          %427 = sbr.rel (%p425) target = $region44
        $region43: #{tpu_custom_call.1} parent=31 // pred_region
          %s428 = smul.u32 2, %s21
          %s430 = ssub.s32 256, 256
          %431 = vsyncadd %s421, %s430
          %s432 = smul.addr %s428, 128
          %s433 = scalar_lea.hbm %s3, %s432
          %s434 = sshll.u32 %s424, 4
          %s435 = int_to_ptr.vmem [resolvable:$true] %s434
          %440 = dma.vmem_to_hbm [thread:$0]  %s435, 256, %s433, %s421, 128, 128, 8
        $region44: #{tpu_custom_call.1} parent=31 // pred_fallthru
          _
      $region32: #{tpu_custom_call.1} parent=5 // pred_fallthru
        _
      %p441 = scmp.le.s32.totalorder 2, %s16
      // Predicated region
      $region45: #{tpu_custom_call.1} parent=5 // pred_check
        %p442 = pneg %p441
      $region46: #{tpu_custom_call.1} parent=5 // pred_check_branch
        %444 = sbr.rel (%p442) target = $region48
      $region47: #{tpu_custom_call.1} parent=5 // pred_region
        %s445 = ssub.s32 %s16, 2
        // Predicated region
        $region49: #{tpu_custom_call.1} parent=47 // pred_check
          %p446 = pneg %p113
        $region50: #{tpu_custom_call.1} parent=47 // pred_check_branch
          %448 = sbr.rel (%p446) target = $region52
        $region51: #{tpu_custom_call.1} parent=47 // pred_region
          %s449 = sand.u32 %s98, 1
          %s450 = scalar_lea.sflag [#allocation4], %s449
          %s451 = sand.u32 %s98, 1
          %s452 = smul.addr %s451, 16
          %s453 = scalar_lea.vmem [#allocation7], %s452
          %454 = dma.done %s450, 256
        $region52: #{tpu_custom_call.1} parent=47 // pred_fallthru
          _
      $region48: #{tpu_custom_call.1} parent=5 // pred_fallthru
        _
    $region6: #{tpu_custom_call.1} parent=1 // loop_footer
      %s20 = sadd.s32 1, %s16
    $region7: #{tpu_custom_call.1} parent=1 // loop_footer_branch
      %15 = sbr.rel target = $region3
    $region8: #{tpu_custom_call.1} parent=1 // loop_exit
      _
    %455 = vsyncpa [#allocation3], 1
    %s456 = scalar_lea.sflag [#allocation3], 1
    %457 = vsyncpa %s456, 1
    %458 = vsyncpa [#allocation6], 1
    %459 = vsyncpa [#allocation4], 1
    %s460 = scalar_lea.sflag [#allocation4], 1
    %461 = vsyncpa %s460, 1

// kernel: tpu_custom_call.1
$region0: #{tpu_custom_call.1}
  #allocation0 [shape = 'u32[]', space=smem, size = 0x4, offset = 0x4, fixed_abs, tag = 'smem constant byte address 0x4 - core index']
  #allocation1 [shape = 'u32[144,128]{1,0:T(1,128)}', space=vmem, size = 0x12000, scoped, tag = 'internal scratch']
  %s0 = inlined_call_operand.hbm [shape: f32[32,384], index: 0, kind: input, shape index: {}]
  %s1 = inlined_call_operand.hbm [shape: f32[384,128], index: 1, kind: input, shape index: {}]
  %s2 = inlined_call_operand.vmem [shape: f32[1,128], index: 2, kind: input, shape index: {}]
  %s3 = inlined_call_operand.hbm [shape: f32[32,128], index: 3, kind: output, shape index: {}]
  %s4 = sld [smem:[#allocation0]]
  $region53: #{tpu_custom_call.1} parent=0
    _
  %s6 = ssub.s32 1, %s4
  %s7 = scalar_select 0, %s6, %s4
  $region1: #{tpu_custom_call.1} parent=0
    #allocation2 [shape = 'u8[49152]{0}', space=vmem, size = 0xc000, scoped, tag = 'input window, operand 0']
    #allocation3 [shape = 's32[2]{0}', space=sflag, size = 0x8, scoped, tag = 'scoped memory for tpu_custom_call.1']
    #allocation4 [shape = 's32[2]{0}', space=sflag, size = 0x8, scoped, tag = 'scoped memory for tpu_custom_call.1']
    #allocation5 [shape = 'u8[196608]{0}', space=vmem, size = 0x30000, scoped, tag = 'input window, operand 1, single buffered']
    #allocation6 [shape = 's32[1]{0}', space=sflag, size = 0x4, scoped, tag = 'scoped memory for tpu_custom_call.1']
    #allocation7 [shape = 'u8[16384]{0}', space=vmem, size = 0x4000, scoped, tag = 'output window, operand 0']
    %8 = vsyncpa [#allocation3], 0
    %s9 = scalar_lea.sflag [#allocation3], 1
    %10 = vsyncpa %s9, 0
    %11 = vsyncpa [#allocation6], 0
    %12 = vsyncpa [#allocation4], 0
    %s13 = scalar_lea.sflag [#allocation4], 1
    %14 = vsyncpa %s13, 0
    loop: start=0, step=1, limit=4
    $region2: #{tpu_custom_call.1} parent=1 // loop_pre_header
      _
    $region3: #{tpu_custom_call.1} parent=1 // loop_header
      %s16 = sphi 0, %s20
      %p17 = scmp.ge.s32.totalorder %s16, 4
      %s26 = sphi 0, %s28
      %s29 = sphi 0, %s26
      %s30 = sphi 0, %s29
      %s46 = sphi 0, %s30
      %s50 = sphi 0, %s50
      %s52 = sphi 0, %s50
      %s53 = sphi 0, %s52
      %s67 = sphi 0, %s53
      %s71 = sphi 0, %s71
      %s73 = sphi 0, %s71
      %s74 = sphi 0, %s73
      %s88 = sphi 0, %s74
      %s94 = sphi 0, %s96
      %s97 = sphi 0, %s94
      %s98 = sphi 0, %s97
      %s114 = sphi 0, %s98
    $region4: #{tpu_custom_call.1} parent=1 // loop_header_branch
      %19 = sbr.rel (%p17) target = $region8
    $region5: #{tpu_custom_call.1} parent=1 // loop_body
      %s21 = ssub.s32 %s16, 1
      %s22 = ssub.s32 %s16, 2
      %s23 = sadd.s32 %s16, 1
      %s24 = ssub.s32 %s16, %s23
      %p25 = scmp.eq.s32.totalorder %s24, 0
      %s27 = sadd.s32 %s26, 1
      %s28 = scalar_select %p25, %s26, %s27
      %p31 = pneg %p25
      %p32 = scmp.eq.s32.totalorder %s16, 1
      %p33 = por %p31, %p32
      %p34 = scmp.ne.s32.totalorder %s26, %s29
      %p35 = scmp.eq.s32.totalorder %s16, 0
      %p36 = por %p34, %p35
      %p37 = scmp.ne.s32.totalorder %s26, %s29
      %p38 = scmp.eq.s32.totalorder %s21, 1
      %p39 = por %p37, %p38
      %p40 = scmp.ne.s32.totalorder %s29, %s30
      %p41 = scmp.eq.s32.totalorder %s21, 0
      %p42 = por %p40, %p41
      %p43 = scmp.ne.s32.totalorder %s29, %s30
      %p44 = scmp.eq.s32.totalorder %s22, 1
      %p45 = por %p43, %p44
      %p47 = scmp.ne.s32.totalorder %s30, %s46
      %p48 = scmp.eq.s32.totalorder %s22, 0
      %p49 = por %p47, %p48
      %s51 = sadd.s32 %s50, 1
      %p54 = scmp.eq.s32.totalorder %s16, 1
      %p55 = scmp.ne.s32.totalorder %s50, %s52
      %p56 = scmp.eq.s32.totalorder %s16, 0
      %p57 = por %p55, %p56
      %p58 = scmp.ne.s32.totalorder %s50, %s52
      %p59 = scmp.eq.s32.totalorder %s21, 1
      %p60 = por %p58, %p59
      %p61 = scmp.ne.s32.totalorder %s52, %s53
      %p62 = scmp.eq.s32.totalorder %s21, 0
      %p63 = por %p61, %p62
      %p64 = scmp.ne.s32.totalorder %s52, %s53
      %p65 = scmp.eq.s32.totalorder %s22, 1
      %p66 = por %p64, %p65
      %p68 = scmp.ne.s32.totalorder %s53, %s67
      %p69 = scmp.eq.s32.totalorder %s22, 0
      %p70 = por %p68, %p69
      %s72 = sadd.s32 %s71, 1
      %p75 = scmp.eq.s32.totalorder %s16, 1
      %p76 = scmp.ne.s32.totalorder %s71, %s73
      %p77 = scmp.eq.s32.totalorder %s16, 0
      %p78 = por %p76, %p77
      %p79 = scmp.ne.s32.totalorder %s71, %s73
      %p80 = scmp.eq.s32.totalorder %s21, 1
      %p81 = por %p79, %p80
      %p82 = scmp.ne.s32.totalorder %s73, %s74
      %p83 = scmp.eq.s32.totalorder %s21, 0
      %p84 = por %p82, %p83
      %p85 = scmp.ne.s32.totalorder %s73, %s74
      %p86 = scmp.eq.s32.totalorder %s22, 1
      %p87 = por %p85, %p86
      %p89 = scmp.ne.s32.totalorder %s74, %s88
      %p90 = scmp.eq.s32.totalorder %s22, 0
      %p91 = por %p89, %p90
      %s92 = ssub.s32 %s16, %s23
      %p93 = scmp.eq.s32.totalorder %s92, 0
      %s95 = sadd.s32 %s94, 1
      %s96 = scalar_select %p93, %s94, %s95
      %p99 = pneg %p93
      %p100 = scmp.eq.s32.totalorder %s16, 1
      %p101 = por %p99, %p100
      %p102 = scmp.ne.s32.totalorder %s94, %s97
      %p103 = scmp.eq.s32.totalorder %s16, 0
      %p104 = por %p102, %p103
      %p105 = scmp.ne.s32.totalorder %s94, %s97
      %p106 = scmp.eq.s32.totalorder %s21, 1
      %p107 = por %p105, %p106
      %p108 = scmp.ne.s32.totalorder %s97, %s98
      %p109 = scmp.eq.s32.totalorder %s21, 0
      %p110 = por %p108, %p109
      %p111 = scmp.ne.s32.totalorder %s97, %s98
      %p112 = scmp.eq.s32.totalorder %s22, 1
      %p113 = por %p111, %p112
      %p115 = scmp.ne.s32.totalorder %s98, %s114
      %p116 = scmp.eq.s32.totalorder %s22, 0
      %p117 = por %p115, %p116
      %p118 = scmp.le.s32.totalorder 1, %s16
      %p119 = scmp.lt.s32.totalorder %s16, 3
      %p120 = pnand %p118, %p119
      %p121 = pneg %p120
      // Predicated region
      $region9: #{tpu_custom_call.1} parent=5 // pred_check
        _
      $region10: #{tpu_custom_call.1} parent=5 // pred_check_branch
        %123 = sbr.rel (%p120) target = $region12
      $region11: #{tpu_custom_call.1} parent=5 // pred_region
        %s124 = ssub.s32 %s16, 1
        // Predicated region
        $region13: #{tpu_custom_call.1} parent=11 // pred_check
          %p125 = pneg %p63
        $region14: #{tpu_custom_call.1} parent=11 // pred_check_branch
          %127 = sbr.rel (%p125) target = $region16
        $region15: #{tpu_custom_call.1} parent=11 // pred_region
          %s129 = ssub.s32 6144, 6144
          %130 = vsyncadd [#allocation6], %s129
          %s131 = sshll.u32 [#allocation5], 4
          %s132 = int_to_ptr.vmem [resolvable:$true] %s131
          %137 = dma.hbm_to_vmem [thread:$0]  %s1, 6144, %s132, [#allocation6], 128, 128, 8
        $region16: #{tpu_custom_call.1} parent=11 // pred_fallthru
          _
        // Predicated region
        $region17: #{tpu_custom_call.1} parent=11 // pred_check
          %p138 = pneg %p84
        $region18: #{tpu_custom_call.1} parent=11 // pred_check_branch
          %140 = sbr.rel (%p138) target = $region20
        $region19: #{tpu_custom_call.1} parent=11 // pred_region
          _
        $region20: #{tpu_custom_call.1} parent=11 // pred_fallthru
          _
      $region12: #{tpu_custom_call.1} parent=5 // pred_fallthru
        _
      %p141 = scmp.lt.s32.totalorder %s16, 2
      // Predicated region
      $region21: #{tpu_custom_call.1} parent=5 // pred_check
        %p142 = pneg %p141
      $region22: #{tpu_custom_call.1} parent=5 // pred_check_branch
        %144 = sbr.rel (%p142) target = $region24
      $region23: #{tpu_custom_call.1} parent=5 // pred_region
        // Predicated region
        $region25: #{tpu_custom_call.1} parent=23 // pred_check
          %p145 = pneg %p36
        $region26: #{tpu_custom_call.1} parent=23 // pred_check_branch
          %147 = sbr.rel (%p145) target = $region28
        $region27: #{tpu_custom_call.1} parent=23 // pred_region
          %s148 = sand.u32 %s26, 1
          %s149 = scalar_lea.sflag [#allocation3], %s148
          %s150 = sand.u32 %s26, 1
          %s151 = smul.addr %s150, 48
          %s152 = scalar_lea.vmem [#allocation2], %s151
          %s153 = smul.u32 2, %s16
          %s155 = ssub.s32 768, 768
          %156 = vsyncadd %s149, %s155
          %s157 = smul.addr %s153, 3
          %s158 = smul.addr %s157, 128
          %s159 = scalar_lea.hbm %s0, %s158
          %s160 = sshll.u32 %s152, 4
          %s161 = int_to_ptr.vmem [resolvable:$true] %s160
          %166 = dma.hbm_to_vmem [thread:$0]  %s159, 768, %s161, %s149, 384, 384, 24
        $region28: #{tpu_custom_call.1} parent=23 // pred_fallthru
          _
      $region24: #{tpu_custom_call.1} parent=5 // pred_fallthru
        _
      %p167 = scmp.le.s32.totalorder 1, %s16
      %p168 = scmp.lt.s32.totalorder %s16, 3
      %p169 = pnand %p167, %p168
      %p170 = pneg %p169
      // Predicated region
      $region29: #{tpu_custom_call.1} parent=5 // pred_check
        _
      $region30: #{tpu_custom_call.1} parent=5 // pred_check_branch
        %172 = sbr.rel (%p169) target = $region32
      $region31: #{tpu_custom_call.1} parent=5 // pred_region
        %s173 = ssub.s32 %s16, 1
        %s174 = sand.u32 %s29, 1
        %s175 = scalar_lea.sflag [#allocation3], %s174
        %s176 = sand.u32 %s29, 1
        %s177 = smul.addr %s176, 48
        %s178 = scalar_lea.vmem [#allocation2], %s177
        // Predicated region
        $region33: #{tpu_custom_call.1} parent=31 // pred_check
          %p179 = pneg %p42
        $region34: #{tpu_custom_call.1} parent=31 // pred_check_branch
          %181 = sbr.rel (%p179) target = $region36
        $region35: #{tpu_custom_call.1} parent=31 // pred_region
          %182 = dma.done %s175, 768
        $region36: #{tpu_custom_call.1} parent=31 // pred_fallthru
          _
        // Predicated region
        $region37: #{tpu_custom_call.1} parent=31 // pred_check
          %p183 = pneg %p63
        $region38: #{tpu_custom_call.1} parent=31 // pred_check_branch
          %185 = sbr.rel (%p183) target = $region40
        $region39: #{tpu_custom_call.1} parent=31 // pred_region
          %186 = dma.done [#allocation6], 6144
        $region40: #{tpu_custom_call.1} parent=31 // pred_fallthru
          _
        %s187 = sand.u32 %s29, 1
        %s188 = scalar_lea.sflag [#allocation3], %s187
        %s189 = sand.u32 %s29, 1
        %s190 = smul.addr %s189, 48
        %s191 = scalar_lea.vmem [#allocation2], %s190
        %p192 = pneg %p42
        %p193 = pneg %p39
        %p194 = pneg %p63
        %p195 = pneg %p60
        %p196 = pneg %p84
        %p197 = pneg %p81
        %p198 = pneg %p110
        %p199 = pneg %p107
        %s200 = sand.u32 %s97, 1
        %s201 = scalar_lea.sflag [#allocation4], %s200
        %s202 = sand.u32 %s97, 1
        %s203 = smul.addr %s202, 16
        %s204 = scalar_lea.vmem [#allocation7], %s203
        %s205 = smul.u32 2, %s21
        %s206 = smul.u32 2, %s21
        %v207 = vld [vmem:[%s178] sm:$0xff]
        %v208 = vld [vmem:[%s178 + $0x8] sm:$0xff]
        %v209 = vld [vmem:[%s178 + $0x10] sm:$0xff]
        %v210 = vld [vmem:[%s178 + $0x18] sm:$0xff]
        %v211 = vld [vmem:[%s178 + $0x20] sm:$0xff]
        %v212 = vld [vmem:[%s178 + $0x28] sm:$0xff]
        %v213 = vld [vmem:[#allocation5] sm:$0xff]
        %v214 = vld [vmem:[#allocation5 + $0x8] sm:$0xff]
        %v215 = vld [vmem:[#allocation5 + $0x10] sm:$0xff]
        %v216 = vld [vmem:[#allocation5 + $0x18] sm:$0xff]
        %v217 = vld [vmem:[#allocation5 + $0x20] sm:$0xff]
        %v218 = vld [vmem:[#allocation5 + $0x28] sm:$0xff]
        %v219 = vld [vmem:[#allocation5 + $0x30] sm:$0xff]
        %v220 = vld [vmem:[#allocation5 + $0x38] sm:$0xff]
        %v221 = vld [vmem:[#allocation5 + $0x40] sm:$0xff]
        %v222 = vld [vmem:[#allocation5 + $0x48] sm:$0xff]
        %v223 = vld [vmem:[#allocation5 + $0x50] sm:$0xff]
        %v224 = vld [vmem:[#allocation5 + $0x58] sm:$0xff]
        %v225 = vld [vmem:[#allocation5 + $0x60] sm:$0xff]
        %v226 = vld [vmem:[#allocation5 + $0x68] sm:$0xff]
        %v227 = vld [vmem:[#allocation5 + $0x70] sm:$0xff]
        %v228 = vld [vmem:[#allocation5 + $0x78] sm:$0xff]
        %v229 = vld [vmem:[#allocation5 + $0x80] sm:$0xff]
        %v230 = vld [vmem:[#allocation5 + $0x88] sm:$0xff]
        %v231 = vld [vmem:[#allocation5 + $0x90] sm:$0xff]
        %v232 = vld [vmem:[#allocation5 + $0x98] sm:$0xff]
        %v233 = vld [vmem:[#allocation5 + $0xa0] sm:$0xff]
        %v234 = vld [vmem:[#allocation5 + $0xa8] sm:$0xff]
        %v235 = vld [vmem:[#allocation5 + $0xb0] sm:$0xff]
        %v236 = vld [vmem:[#allocation5 + $0xb8] sm:$0xff]
        %v237 = vld [vmem:[#allocation5 + $0xc0] sm:$0xff]
        %v238 = vld [vmem:[#allocation5 + $0xc8] sm:$0xff]
        %v239 = vld [vmem:[#allocation5 + $0xd0] sm:$0xff]
        %v240 = vld [vmem:[#allocation5 + $0xd8] sm:$0xff]
        %v241 = vld [vmem:[#allocation5 + $0xe0] sm:$0xff]
        %v242 = vld [vmem:[#allocation5 + $0xe8] sm:$0xff]
        %v243 = vld [vmem:[#allocation5 + $0xf0] sm:$0xff]
        %v244 = vld [vmem:[#allocation5 + $0xf8] sm:$0xff]
        %v245 = vld [vmem:[#allocation5 + $0x100] sm:$0xff]
        %v246 = vld [vmem:[#allocation5 + $0x108] sm:$0xff]
        %v247 = vld [vmem:[#allocation5 + $0x110] sm:$0xff]
        %v248 = vld [vmem:[#allocation5 + $0x118] sm:$0xff]
        %v249 = vld [vmem:[#allocation5 + $0x120] sm:$0xff]
        %v250 = vld [vmem:[#allocation5 + $0x128] sm:$0xff]
        %v251 = vld [vmem:[#allocation5 + $0x130] sm:$0xff]
        %v252 = vld [vmem:[#allocation5 + $0x138] sm:$0xff]
        %v253 = vld [vmem:[#allocation5 + $0x140] sm:$0xff]
        %v254 = vld [vmem:[#allocation5 + $0x148] sm:$0xff]
        %v255 = vld [vmem:[#allocation5 + $0x150] sm:$0xff]
        %v256 = vld [vmem:[#allocation5 + $0x158] sm:$0xff]
        %v257 = vld [vmem:[#allocation5 + $0x160] sm:$0xff]
        %v258 = vld [vmem:[#allocation5 + $0x168] sm:$0xff]
        %v259 = vld [vmem:[#allocation5 + $0x170] sm:$0xff]
        %v260 = vld [vmem:[#allocation5 + $0x178] sm:$0xff]
        %v261 = vld [vmem:[%s2] sm:$0x1]
        %v263 = vlaneseq
        %v264 = vshrl.u32 %v263, 7
        %v265 = vsub.s32 0, %v264
        %v266 = vrot.slane %v261, %v265
        %268 = vmatprep.subr.mxu0 0.0
        %269 = vmatpush1.msra.mxu0 %v213
        %270 = vmatprep.subr.mxu0 0.0
        %271 = vmatpush1.msra.mxu0 %v214
        %272 = vmatprep.subr.mxu0 0.0
        %273 = vmatpush1.msra.mxu0 %v215
        %274 = vmatprep.subr.mxu0 0.0
        %275 = vmatpush1.msra.mxu0 %v216
        %276 = vmatprep.subr.mxu0 0.0
        %277 = vmatpush1.msra.mxu0 %v217
        %278 = vmatprep.subr.mxu0 0.0
        %279 = vmatpush1.msra.mxu0 %v218
        %280 = vmatprep.subr.mxu0 0.0
        %281 = vmatpush1.msra.mxu0 %v219
        %282 = vmatprep.subr.mxu0 0.0
        %283 = vmatpush1.msra.mxu0 %v220
        %284 = vmatprep.subr.mxu0 0.0
        %285 = vmatpush1.msra.mxu0 %v221
        %286 = vmatprep.subr.mxu0 0.0
        %287 = vmatpush1.msra.mxu0 %v222
        %288 = vmatprep.subr.mxu0 0.0
        %289 = vmatpush1.msra.mxu0 %v223
        %290 = vmatprep.subr.mxu0 0.0
        %291 = vmatpush1.msra.mxu0 %v224
        %292 = vmatprep.subr.mxu0 0.0
        %293 = vmatpush1.msra.mxu0 %v225
        %294 = vmatprep.subr.mxu0 0.0
        %295 = vmatpush1.msra.mxu0 %v226
        %296 = vmatprep.subr.mxu0 0.0
        %297 = vmatpush1.msra.mxu0 %v227
        %298 = vmatprep.subr.mxu0 0.0
        %299 = vmatpush1.msra.mxu0 %v228
        %300 = vmatprep.subr.mxu0 0.0
        %301 = vmatpush1.msra.mxu0 %v229
        %302 = vmatprep.subr.mxu0 0.0
        %303 = vmatpush1.msra.mxu0 %v230
        %304 = vmatprep.subr.mxu0 0.0
        %305 = vmatpush1.msra.mxu0 %v231
        %306 = vmatprep.subr.mxu0 0.0
        %307 = vmatpush1.msra.mxu0 %v232
        %308 = vmatprep.subr.mxu0 0.0
        %309 = vmatpush1.msra.mxu0 %v233
        %310 = vmatprep.subr.mxu0 0.0
        %311 = vmatpush1.msra.mxu0 %v234
        %312 = vmatprep.subr.mxu0 0.0
        %313 = vmatpush1.msra.mxu0 %v235
        %314 = vmatprep.subr.mxu0 0.0
        %315 = vmatpush1.msra.mxu0 %v236
        %316 = vmatprep.subr.mxu0 0.0
        %317 = vmatpush1.msra.mxu0 %v237
        %318 = vmatprep.subr.mxu0 0.0
        %319 = vmatpush1.msra.mxu0 %v238
        %320 = vmatprep.subr.mxu0 0.0
        %321 = vmatpush1.msra.mxu0 %v239
        %322 = vmatprep.subr.mxu0 0.0
        %323 = vmatpush1.msra.mxu0 %v240
        %324 = vmatprep.subr.mxu0 0.0
        %325 = vmatpush1.msra.mxu0 %v241
        %326 = vmatprep.subr.mxu0 0.0
        %327 = vmatpush1.msra.mxu0 %v242
        %328 = vmatprep.subr.mxu0 0.0
        %329 = vmatpush1.msra.mxu0 %v243
        %330 = vmatprep.subr.mxu0 0.0
        %331 = vmatpush1.msra.mxu0 %v244
        %332 = vmatprep.mubr.f32.mxu0 %v208
        %333 = vmatmul.mubr.f32.gmra.mrb[0].mxu0 %v207
        %v334 = vpop.f32.mrb[0].mxu0
        %v335 = vadd.f32 %v266, %v334
        %v336 = vpop.f32.mrb[0].mxu0
        %337 = vmatprep.mubr.f32.mxu0 %v211
        %338 = vmatmul.mubr.f32.gmra.mrb[0].mxu0 %v210
        %v339 = vpop.f32.mrb[0].mxu0
        %v340 = vadd.f32 %v266, %v339
        %v341 = vpop.f32.mrb[0].mxu0
        %342 = vdwg.mxu0
        %343 = vmatprep.subr.mxu0 0.0
        %344 = vmatpush1.msra.mxu0 %v245
        %345 = vmatprep.subr.mxu0 0.0
        %346 = vmatpush1.msra.mxu0 %v246
        %347 = vmatprep.subr.mxu0 0.0
        %348 = vmatpush1.msra.mxu0 %v247
        %349 = vmatprep.subr.mxu0 0.0
        %350 = vmatpush1.msra.mxu0 %v248
        %351 = vmatprep.subr.mxu0 0.0
        %352 = vmatpush1.msra.mxu0 %v249
        %353 = vmatprep.subr.mxu0 0.0
        %354 = vmatpush1.msra.mxu0 %v250
        %355 = vmatprep.subr.mxu0 0.0
        %356 = vmatpush1.msra.mxu0 %v251
        %357 = vmatprep.subr.mxu0 0.0
        %358 = vmatpush1.msra.mxu0 %v252
        %359 = vmatprep.subr.mxu0 0.0
        %360 = vmatpush1.msra.mxu0 %v253
        %361 = vmatprep.subr.mxu0 0.0
        %362 = vmatpush1.msra.mxu0 %v254
        %363 = vmatprep.subr.mxu0 0.0
        %364 = vmatpush1.msra.mxu0 %v255
        %365 = vmatprep.subr.mxu0 0.0
        %366 = vmatpush1.msra.mxu0 %v256
        %367 = vmatprep.subr.mxu0 0.0
        %368 = vmatpush1.msra.mxu0 %v257
        %369 = vmatprep.subr.mxu0 0.0
        %370 = vmatpush1.msra.mxu0 %v258
        %371 = vmatprep.subr.mxu0 0.0
        %372 = vmatpush1.msra.mxu0 %v259
        %373 = vmatprep.subr.mxu0 0.0
        %374 = vmatpush1.msra.mxu0 %v260
        %375 = vmatprep.subr.mxu0 0.0
        %376 = vmatpush1.msra.mxu0 0.0
        %377 = vmatprep.subr.mxu0 0.0
        %378 = vmatpush1.msra.mxu0 0.0
        %379 = vmatprep.subr.mxu0 0.0
        %380 = vmatpush1.msra.mxu0 0.0
        %381 = vmatprep.subr.mxu0 0.0
        %382 = vmatpush1.msra.mxu0 0.0
        %383 = vmatprep.subr.mxu0 0.0
        %384 = vmatpush1.msra.mxu0 0.0
        %385 = vmatprep.subr.mxu0 0.0
        %386 = vmatpush1.msra.mxu0 0.0
        %387 = vmatprep.subr.mxu0 0.0
        %388 = vmatpush1.msra.mxu0 0.0
        %389 = vmatprep.subr.mxu0 0.0
        %390 = vmatpush1.msra.mxu0 0.0
        %391 = vmatprep.subr.mxu0 0.0
        %392 = vmatpush1.msra.mxu0 0.0
        %393 = vmatprep.subr.mxu0 0.0
        %394 = vmatpush1.msra.mxu0 0.0
        %395 = vmatprep.subr.mxu0 0.0
        %396 = vmatpush1.msra.mxu0 0.0
        %397 = vmatprep.subr.mxu0 0.0
        %398 = vmatpush1.msra.mxu0 0.0
        %399 = vmatprep.subr.mxu0 0.0
        %400 = vmatpush1.msra.mxu0 0.0
        %401 = vmatprep.subr.mxu0 0.0
        %402 = vmatpush1.msra.mxu0 0.0
        %403 = vmatprep.subr.mxu0 0.0
        %404 = vmatpush1.msra.mxu0 0.0
        %405 = vmatprep.subr.mxu0 0.0
        %406 = vmatpush1.msra.mxu0 0.0
        %407 = vmatprep.mubr.f32.mxu0 0.0
        %408 = vmatmul.mubr.f32.gmra.mrb[0].mxu0 %v209
        %v409 = vpop.f32.mrb[0].mxu0
        %v410 = vadd.f32 %v335, %v409
        %v411 = vpop.f32.mrb[0].mxu0
        %412 = vmatprep.mubr.f32.mxu0 0.0
        %413 = vmatmul.mubr.f32.gmra.mrb[0].mxu0 %v212
        %v414 = vpop.f32.mrb[0].mxu0
        %v415 = vadd.f32 %v340, %v414
        %v416 = vpop.f32.mrb[0].mxu0
        %417 = vdwg.mxu0
        %418 = vst [vmem:[%s204] sm:$0xff] %v410
        %419 = vst [vmem:[%s204 + $0x8] sm:$0xff] %v415
        %s420 = sand.u32 %s97, 1
        %s421 = scalar_lea.sflag [#allocation4], %s420
        %s422 = sand.u32 %s97, 1
        %s423 = smul.addr %s422, 16
        %s424 = scalar_lea.vmem [#allocation7], %s423
        // Predicated region
        $region41: #{tpu_custom_call.1} parent=31 // pred_check
          %p425 = pneg %p107
        $region42: #{tpu_custom_call.1} parent=31 // pred_check_branch
          %427 = sbr.rel (%p425) target = $region44
        $region43: #{tpu_custom_call.1} parent=31 // pred_region
          %s428 = smul.u32 2, %s21
          %s430 = ssub.s32 256, 256
          %431 = vsyncadd %s421, %s430
          %s432 = smul.addr %s428, 128
          %s433 = scalar_lea.hbm %s3, %s432
          %s434 = sshll.u32 %s424, 4
          %s435 = int_to_ptr.vmem [resolvable:$true] %s434
          %440 = dma.vmem_to_hbm [thread:$0]  %s435, 256, %s433, %s421, 128, 128, 8
        $region44: #{tpu_custom_call.1} parent=31 // pred_fallthru
          _
      $region32: #{tpu_custom_call.1} parent=5 // pred_fallthru
        _
      %p441 = scmp.le.s32.totalorder 2, %s16
      // Predicated region
      $region45: #{tpu_custom_call.1} parent=5 // pred_check
        %p442 = pneg %p441
      $region46: #{tpu_custom_call.1} parent=5 // pred_check_branch
        %444 = sbr.rel (%p442) target = $region48
      $region47: #{tpu_custom_call.1} parent=5 // pred_region
        %s445 = ssub.s32 %s16, 2
        // Predicated region
        $region49: #{tpu_custom_call.1} parent=47 // pred_check
          %p446 = pneg %p113
        $region50: #{tpu_custom_call.1} parent=47 // pred_check_branch
          %448 = sbr.rel (%p446) target = $region52
        $region51: #{tpu_custom_call.1} parent=47 // pred_region
          %s449 = sand.u32 %s98, 1
          %s450 = scalar_lea.sflag [#allocation4], %s449
          %s451 = sand.u32 %s98, 1
          %s452 = smul.addr %s451, 16
          %s453 = scalar_lea.vmem [#allocation7], %s452
          %454 = dma.done %s450, 256
        $region52: #{tpu_custom_call.1} parent=47 // pred_fallthru
          _
      $region48: #{tpu_custom_call.1} parent=5 // pred_fallthru
        _
    $region6: #{tpu_custom_call.1} parent=1 // loop_footer
      %s20 = sadd.s32 1, %s16
    $region7: #{tpu_custom_call.1} parent=1 // loop_footer_branch
      %15 = sbr.rel target = $region3
    $region8: #{tpu_custom_call.1} parent=1 // loop_exit
      _
    %455 = vsyncpa [#allocation3], 1
    %s456 = scalar_lea.sflag [#allocation3], 1
    %457 = vsyncpa %s456, 1
    %458 = vsyncpa [#allocation6], 1
    %459 = vsyncpa [#allocation4], 1
    %s460 = scalar_lea.sflag [#allocation4], 1
    %461 = vsyncpa %s460, 1

</llo_original>
